<compile_context>
chip_gen: v6e
topology: v6e:2x2x1
jax: 0.10.0
libtpu: 0.0.40
codegen_flags: <defaults>
</compile_context>

<pallas_src>
import jax
import jax.numpy as jnp
from jax.experimental import pallas as pl
from jax.experimental.pallas import tpu as pltpu

_LANE = 128
# ~8 MiB per input block (see header). Combined with the explicit
# vmem_limit_bytes below this fits v5e / v6e / v7x.
_TARGET_TILE_BYTES = 8 * 1024 * 1024
_VMEM_MARGIN_BYTES = 6 * 1024 * 1024


def _round_up(a: int, m: int) -> int:
    return ((a + m - 1) // m) * m


def _mac_kernel(x_ref, o_ref):
    # x_ref: (row_tile, hw) in VMEM; o_ref: (1, row_tile) lane-dense.
    o_ref[...] = jnp.max(x_ref[...], axis=-1)[None, :]


def _make_mac_kernel_hw_tiled(hw_tile: int, tail: int):
    """Path B kernel: running max over the spatial (hw) grid axis.

    `tail` is the statically-known valid width of the FINAL spatial block
    (== hw_tile when hw divides evenly, in which case no masking is needed).
    """

    def kernel(x_ref, o_ref):
        k = pl.program_id(1)
        last = pl.num_programs(1) - 1

        def update(m):
            @pl.when(k == 0)
            def _():
                o_ref[...] = m

            @pl.when(k != 0)
            def _():
                o_ref[...] = jnp.maximum(o_ref[...], m)

        if tail == hw_tile:
            update(jnp.max(x_ref[...], axis=-1)[None, :])
        else:
            # Only the final (partial) spatial block needs special handling:
            # reduce over the statically-sized valid prefix. Earlier blocks pay
            # zero masking cost.
            @pl.when(k != last)
            def _():
                update(jnp.max(x_ref[...], axis=-1)[None, :])

            @pl.when(k == last)
            def _():
                update(jnp.max(x_ref[:, :tail], axis=-1)[None, :])

    return kernel


def _buffered_in_spec(block_shape, index_map, n_buffers):
    """Input BlockSpec with n-deep pipelining; fall back to the default
    double-buffering if this JAX version lacks pipeline_mode / pl.Buffered."""
    try:
        return pl.BlockSpec(block_shape, index_map,
                            pipeline_mode=pl.Buffered(n_buffers))
    except Exception:
        return pl.BlockSpec(block_shape, index_map)


def mac(x: jax.Array) -> jax.Array:
    """Global spatial max pooling (MAC). x: (B, C, H, W) -> (B, C, 1, 1)."""
    B, C, H, W = x.shape
    rows = B * C
    hw = H * W
    itemsize = jnp.dtype(x.dtype).itemsize

    # Tiny spatial extent: Pallas gives no advantage (see header); plain XLA
    # reduce also sidesteps the lane-padding VMEM blowup on v5e.
    if hw < _LANE or rows == 0:
        return jnp.max(x, axis=(2, 3), keepdims=True)

    x2 = x.reshape(rows, hw)

    # ---- row-tile selection --------------------------------------------------
    # Budget with the lane-padded row width: the last dim of every VMEM tile is
    # padded to a multiple of 128 lanes.
    padded_hw = _round_up(hw, _LANE)
    row_bytes = padded_hw * itemsize
    if rows < _LANE:
        # Tiny row extent: take it whole (full-extent block is always legal).
        row_tile = rows
    else:
        max_rows_by_vmem = max(
            _LANE, (_TARGET_TILE_BYTES // row_bytes) // _LANE * _LANE)
        row_tile = min(
            max_rows_by_vmem,                               # VMEM budget (padded)
            (rows // _LANE) * _LANE,                        # never exceed array
            # Aim for >=4 grid steps when rows allow: balanced megacore split on
            # v7x and per-core overlap of step i+1 DMA with step i epilogue.
            max(_LANE, _round_up(pl.cdiv(rows, 4), _LANE)),
        )
    num_row_tiles = pl.cdiv(rows, row_tile)

    cost = pl.CostEstimate(
        flops=rows * hw,                       # one compare per element
        transcendentals=0,
        bytes_accessed=rows * hw * itemsize + rows * itemsize,
    )

    if row_tile * row_bytes <= _TARGET_TILE_BYTES:
        # ---- Path A: whole spatial extent per block (typical H*W) ------------
        block_bytes = row_tile * row_bytes
        vmem_limit = int(max(2 * block_bytes + _VMEM_MARGIN_BYTES, 16 << 20))
        out = pl.pallas_call(
            _mac_kernel,
            out_shape=jax.ShapeDtypeStruct((num_row_tiles, row_tile), x.dtype),
            grid_spec=pltpu.PrefetchScalarGridSpec(
                num_scalar_prefetch=0,
                grid=(num_row_tiles,),
                in_specs=[pl.BlockSpec((row_tile, hw), lambda i: (i, 0))],
                out_specs=pl.BlockSpec((1, row_tile), lambda i: (i, 0)),
            ),
            compiler_params=pltpu.CompilerParams(
                dimension_semantics=("parallel",),
                vmem_limit_bytes=vmem_limit),
            cost_estimate=cost,
        )(x2)
    else:
        # ---- Path B: also tile the spatial axis; running max across it -------
        hw_tile = max(
            _LANE,
            (_TARGET_TILE_BYTES // (row_tile * itemsize)) // _LANE * _LANE)
        hw_tile = min(hw_tile, padded_hw)
        num_hw_tiles = pl.cdiv(hw, hw_tile)
        tail = hw - (num_hw_tiles - 1) * hw_tile   # static valid width of last block
        block_bytes = row_tile * hw_tile * itemsize
        n_buffers = 3   # third input buffer hides step-boundary DMA bubbles
        vmem_limit = int(max(n_buffers * block_bytes + _VMEM_MARGIN_BYTES,
                             16 << 20))
        kernel = _make_mac_kernel_hw_tiled(hw_tile, tail)
        out = pl.pallas_call(
            kernel,
            out_shape=jax.ShapeDtypeStruct((num_row_tiles, row_tile), x.dtype),
            grid_spec=pltpu.PrefetchScalarGridSpec(
                num_scalar_prefetch=0,
                grid=(num_row_tiles, num_hw_tiles),
                in_specs=[_buffered_in_spec((row_tile, hw_tile),
                                            lambda i, k: (i, k), n_buffers)],
                out_specs=pl.BlockSpec((1, row_tile), lambda i, k: (i, 0)),
            ),
            compiler_params=pltpu.CompilerParams(
                dimension_semantics=("parallel", "arbitrary"),
                vmem_limit_bytes=vmem_limit),
            cost_estimate=cost,
        )(x2)

    # Rows beyond `rows` (from a partial final row block) hold garbage; drop them.
    return out.reshape(num_row_tiles * row_tile)[:rows].reshape(B, C, 1, 1)


if __name__ == "__main__":
    def _check(shape, seed):
        x = jax.random.normal(jax.random.PRNGKey(seed), shape, dtype=jnp.float32)
        y = jax.block_until_ready(mac(x))
        ref = jnp.max(x, axis=(2, 3), keepdims=True)
        assert y.shape == (shape[0], shape[1], 1, 1), (shape, y.shape)
        assert jnp.allclose(y, ref), f"MAC kernel mismatch vs reference {shape}"

    # Primary check: NCHW feature map implied by the module's forward.
    _check((2, 4, 16, 16), 0)     # Path A, hw = 256 (multiple of 128)
    _check((2, 3, 13, 11), 1)     # Path A, odd hw = 143 (lane-tail handled by Mosaic)
    _check((3, 50, 16, 16), 2)    # Path A, rows = 150 -> row tiling + partial final row block
    _check((2, 3, 7, 5), 3)       # hw < 128 -> XLA fallback path
    _check((2, 4, 520, 520), 4)   # Path B: spatial axis tiled, running max + static tail slice

    print("KERNEL_OK")
</pallas_src>

<mosaic_0001>
module attributes {stable_mosaic.version = 11 : i64} {
  func.func @_mac_kernel(%arg0: i32, %arg1: memref<8x256xf32, #tpu.memory_space<vmem>>, %arg2: memref<1x8xf32, #tpu.memory_space<vmem>>) attributes {dimension_semantics = [#tpu.dimension_semantics<parallel>], iteration_bounds = array<i64: 1>, scalar_prefetch = 0 : i64, scratch_operands = 0 : i64, tpu.core_type = #tpu.core_type<tc>, window_params = [{transform_indices = @transform_0, window_bounds = array<i64: 8, 256>}, {transform_indices = @transform_1, window_bounds = array<i64: 1, 8>}]} {
    %c0 = arith.constant 0 : index
    %c0_0 = arith.constant 0 : index
    %0 = vector.load %arg1[%c0, %c0_0] : memref<8x256xf32, #tpu.memory_space<vmem>>, vector<8x256xf32>
    %cst = arith.constant dense<0xFF800000> : vector<8xf32>
    %1 = vector.multi_reduction <maximumf>, %0, %cst [1] : vector<8x256xf32> to vector<8xf32>
    %2 = vector.shape_cast %1 : vector<8xf32> to vector<1x8xf32>
    %c0_1 = arith.constant 0 : index
    %c0_2 = arith.constant 0 : index
    %3 = vector.load %arg2[%c0_1, %c0_2] : memref<1x8xf32, #tpu.memory_space<vmem>>, vector<1x8xf32>
    tpu.vector_store %arg2[%c0_1, %c0_2], %2 {strides = array<i32>} : memref<1x8xf32, #tpu.memory_space<vmem>>, vector<1x8xf32>,
    return
  }
  func.func @transform_0(%arg0: i32) -> (i32, i32) {
    %c0_i32 = arith.constant 0 : i32
    %c0_i32_0 = arith.constant 0 : i32
    return %arg0, %c0_i32 : i32, i32
  }
  func.func @transform_1(%arg0: i32) -> (i32, i32) {
    %c0_i32 = arith.constant 0 : i32
    %c0_i32_0 = arith.constant 0 : i32
    return %arg0, %c0_i32 : i32, i32
  }
}

</mosaic_0001>

<llo_original>
// kernel: tpu_custom_call.1
$region0: #{tpu_custom_call.1}
  #allocation0 [shape = 'u32[]', space=smem, size = 0x4, offset = 0x4, fixed_abs, tag = 'smem constant byte address 0x4 - core index']
  #allocation1 [shape = 'u32[144,128]{1,0:T(1,128)}', space=vmem, size = 0x12000, scoped, tag = 'internal scratch']
  %s0 = inlined_call_operand.hbm [shape: f32[8,256], index: 0, kind: input, shape index: {}]
  %s1 = inlined_call_operand.hbm [shape: f32[1,8], index: 1, kind: output, shape index: {}]
  %s2 = sld [smem:[#allocation0]]
  $region18: #{tpu_custom_call.1} parent=0
    _
  %s4 = ssub.s32 1, %s2
  %s5 = scalar_select 0, %s4, %s2
  $region1: #{tpu_custom_call.1} parent=0
    #allocation2 [shape = 'u8[8192]{0}', space=vmem, size = 0x2000, scoped, tag = 'input window, operand 0, single buffered']
    #allocation3 [shape = 's32[1]{0}', space=sflag, size = 0x4, scoped, tag = 'scoped memory for tpu_custom_call.1']
    #allocation4 [shape = 's32[1]{0}', space=sflag, size = 0x4, scoped, tag = 'scoped memory for tpu_custom_call.1']
    #allocation5 [shape = 'u8[512]{0}', space=vmem, size = 0x400, scoped, tag = 'output window, operand 0, single buffered']
    %6 = vsyncpa [#allocation3], 0
    %7 = vsyncpa [#allocation4], 0
    // Predicated region
    $region2: #{tpu_custom_call.1} parent=1 // pred_check
      _
    $region3: #{tpu_custom_call.1} parent=1 // pred_check_branch
      %9 = sbr.rel (0) target = $region5
    $region4: #{tpu_custom_call.1} parent=1 // pred_region
      %s11 = ssub.s32 256, 256
      %12 = vsyncadd [#allocation3], %s11
      %s14 = sshll.u32 [#allocation2], 4
      %s15 = int_to_ptr.vmem [resolvable:$true] %s14
      %17 = dma.hbm_to_vmem [thread:$0]  %s0, 256, %s15, [#allocation3]
    $region5: #{tpu_custom_call.1} parent=1 // pred_fallthru
      _
    // Predicated region
    $region6: #{tpu_custom_call.1} parent=1 // pred_check
      _
    $region7: #{tpu_custom_call.1} parent=1 // pred_check_branch
      %19 = sbr.rel (0) target = $region9
    $region8: #{tpu_custom_call.1} parent=1 // pred_region
      %20 = dma.done [#allocation3], 256
    $region9: #{tpu_custom_call.1} parent=1 // pred_fallthru
      _
    %v21 = vld [vmem:[#allocation2] sm:$0xff]
    %v22 = vld [vmem:[#allocation2 + $0x8] sm:$0xff]
    %v23 = vmax.f32 %v21, %v22
    %24 = vmax.xlane.f32.xlu0 %v23
    %v25 = vpop.xlane.xlu0 %24
    %v27 = vlaneseq
    %v28 = vand.u32 %v27, 127
    %v29 = vlaneseq
    %v30 = vshrl.u32 %v29, 7
    %v31 = vsub.s32 %v28, %v30
    %v32 = vrot.slane %v25, %v31
    %vm34 = vcmask 57344
    %35 = vst.msk [vmem:[#allocation5] sm:$0x1] %vm34, %v32
    // Predicated region
    $region10: #{tpu_custom_call.1} parent=1 // pred_check
      _
    $region11: #{tpu_custom_call.1} parent=1 // pred_check_branch
      %37 = sbr.rel (0) target = $region13
    $region12: #{tpu_custom_call.1} parent=1 // pred_region
      %s39 = ssub.s32 16, 16
      %40 = vsyncadd [#allocation4], %s39
      %s42 = sshll.u32 [#allocation5], 4
      %s43 = int_to_ptr.vmem [resolvable:$true] %s42
      %45 = dma.vmem_to_hbm [thread:$0]  %s43, 16, %s1, [#allocation4]
    $region13: #{tpu_custom_call.1} parent=1 // pred_fallthru
      _
    // Predicated region
    $region14: #{tpu_custom_call.1} parent=1 // pred_check
      _
    $region15: #{tpu_custom_call.1} parent=1 // pred_check_branch
      %47 = sbr.rel (0) target = $region17
    $region16: #{tpu_custom_call.1} parent=1 // pred_region
      %48 = dma.done [#allocation4], 16
    $region17: #{tpu_custom_call.1} parent=1 // pred_fallthru
      _
    %49 = vsyncpa [#allocation3], 1
    %50 = vsyncpa [#allocation4], 1

</llo_original>
